<compile_context>
chip_gen: v7x
topology: tpu7x:2x2x1
jax: 0.10.0
libtpu: 0.0.40
codegen_flags: <defaults>
</compile_context>

<pallas_src>
import numpy as np
import jax
import jax.numpy as jnp
from jax.experimental import pallas as pl
from jax.experimental.pallas import tpu as pltpu


def _copy_kernel(x_ref, o_ref):
    # Single whole-array block resident in VMEM: pure pass-through.
    o_ref[...] = x_ref[...]


def pallas_identity(x):
    """Gridless, aliased Pallas pass-through of x1 (the module ignores x1,
    but this is the only tensor hot path reachable from forward)."""
    return pl.pallas_call(
        _copy_kernel,
        out_shape=jax.ShapeDtypeStruct(x.shape, x.dtype),
        in_specs=[pl.BlockSpec(memory_space=pltpu.MemorySpace.VMEM)],
        out_specs=pl.BlockSpec(memory_space=pltpu.MemorySpace.VMEM),
        input_output_aliases={0: 0},  # reuse x1's HBM buffer for the output
    )(x)


# v = [torch.cat(x, 1) for x in [[], [], []]]
# TODO(synk): torch.cat of an empty list raises in PyTorch and
# jnp.concatenate([]) raises in JAX; there is no Pallas equivalent of a
# zero-operand concat.  Each element is modeled as an empty (1, 0) tensor,
# built once here (hoisted out of the forward path per perf review).
_EMPTY_CAT_RESULTS = tuple(jnp.zeros((1, 0), dtype=jnp.float32) for _ in range(3))


def model_forward(x1):
    """Pallas/JAX analogue of Model.forward.

    Returns (degenerate_result, x1_passthrough).  NOTE: the reference forward
    raises at runtime, so the (0,)-shaped result is a modeling choice, not an
    exact equivalent.
    """
    # Touch x1 on-device through the minimal Pallas kernel.
    x1_out = pallas_identity(x1)

    v = list(_EMPTY_CAT_RESULTS)

    # print(len(v))  -- host-side side effect; keep this function un-jitted
    # (under jax.jit this would fire only at trace time).
    print(len(v))

    # return v[0][0]  -- indexing row 0 of an empty-width tensor -> shape (0,)
    result = v[0][0]
    return result, x1_out


if __name__ == "__main__":
    key = jax.random.PRNGKey(0)
    # Small, tile-friendly shape (one f32 vreg); forward ignores x1 anyway.
    x1 = jax.random.normal(key, (8, 128), dtype=jnp.float32)
    # Host baseline captured before the aliased pallas_call (test-only sync).
    x1_host = np.asarray(x1)

    result, x1_out = model_forward(x1)
    jax.block_until_ready(result)
    jax.block_until_ready(x1_out)

    # Sanity: the Pallas pass-through must round-trip x1 exactly.
    assert result.shape == (0,)
    assert x1_out.shape == x1_host.shape
    np.testing.assert_array_equal(np.asarray(x1_out), x1_host)

    print("KERNEL_OK")
</pallas_src>

<mosaic_0001>
module attributes {stable_mosaic.version = 11 : i64} {
  func.func @_copy_kernel(%arg0: memref<8x128xf32, #tpu.memory_space<vmem>>, %arg1: memref<8x128xf32, #tpu.memory_space<vmem>>) attributes {dimension_semantics = [], scalar_prefetch = 0 : i64, scratch_operands = 0 : i64, tpu.core_type = #tpu.core_type<tc>} {
    %c0 = arith.constant 0 : index
    %c0_0 = arith.constant 0 : index
    %0 = vector.load %arg0[%c0, %c0_0] : memref<8x128xf32, #tpu.memory_space<vmem>>, vector<8x128xf32>
    %c0_1 = arith.constant 0 : index
    %c0_2 = arith.constant 0 : index
    %1 = vector.load %arg1[%c0_1, %c0_2] : memref<8x128xf32, #tpu.memory_space<vmem>>, vector<8x128xf32>
    tpu.vector_store %arg1[%c0_1, %c0_2], %0 {strides = array<i32>} : memref<8x128xf32, #tpu.memory_space<vmem>>, vector<8x128xf32>,
    return
  }
}

</mosaic_0001>

<llo_original>
// kernel: tpu_custom_call.1
$region0: #{tpu_custom_call.1}
  #allocation0 [shape = 'u32[]', space=smem, size = 0x4, offset = 0x4, fixed_abs, tag = 'smem constant byte address 0x4 - core index']
  #allocation1 [shape = 'u32[144,128]{1,0:T(1,128)}', space=vmem, size = 0x12000, scoped, tag = 'internal scratch']
  %s0 = inlined_call_operand.hbm [shape: f32[8,128], index: 0, kind: input, shape index: {}, may-alias: {0,1}]
  %s1 = inlined_call_operand.hbm [shape: f32[8,128], index: 1, kind: output, shape index: {}, may-alias: {0,1}]
  %s2 = sld [smem:[#allocation0]]
  $region18: #{tpu_custom_call.1} parent=0
    _
  %s4 = ssub.s32 1, %s2
  %s5 = scalar_select 0, %s4, %s2
  $region1: #{tpu_custom_call.1} parent=0
    #allocation2 [shape = 'u8[4096]{0}', space=vmem, size = 0x1000, scoped, tag = 'input window, operand 0, single buffered']
    #allocation3 [shape = 's32[1]{0}', space=sflag, size = 0x4, scoped, tag = 'scoped memory for tpu_custom_call.1']
    #allocation4 [shape = 's32[1]{0}', space=sflag, size = 0x4, scoped, tag = 'scoped memory for tpu_custom_call.1']
    #allocation5 [shape = 'u8[4096]{0}', space=vmem, size = 0x1000, scoped, tag = 'output window, operand 0, single buffered']
    %6 = vsyncpa [#allocation3], 0
    %7 = vsyncpa [#allocation4], 0
    // Predicated region
    $region2: #{tpu_custom_call.1} parent=1 // pred_check
      _
    $region3: #{tpu_custom_call.1} parent=1 // pred_check_branch
      %9 = sbr.rel (0) target = $region5
    $region4: #{tpu_custom_call.1} parent=1 // pred_region
      %s11 = ssub.s32 128, 128
      %12 = vsyncadd [#allocation3], %s11
      %s14 = sshll.u32 [#allocation2], 4
      %s15 = int_to_ptr.vmem [resolvable:$true] %s14
      %17 = dma.hbm_to_vmem [thread:$0]  %s0, 128, %s15, [#allocation3]
    $region5: #{tpu_custom_call.1} parent=1 // pred_fallthru
      _
    // Predicated region
    $region6: #{tpu_custom_call.1} parent=1 // pred_check
      _
    $region7: #{tpu_custom_call.1} parent=1 // pred_check_branch
      %19 = sbr.rel (0) target = $region9
    $region8: #{tpu_custom_call.1} parent=1 // pred_region
      %20 = dma.done [#allocation3], 128
    $region9: #{tpu_custom_call.1} parent=1 // pred_fallthru
      _
    %v21 = vld [vmem:[#allocation2] sm:$0xff]
    %22 = vst [vmem:[#allocation5] sm:$0xff] %v21
    // Predicated region
    $region10: #{tpu_custom_call.1} parent=1 // pred_check
      _
    $region11: #{tpu_custom_call.1} parent=1 // pred_check_branch
      %24 = sbr.rel (0) target = $region13
    $region12: #{tpu_custom_call.1} parent=1 // pred_region
      %s26 = ssub.s32 128, 128
      %27 = vsyncadd [#allocation4], %s26
      %s29 = sshll.u32 [#allocation5], 4
      %s30 = int_to_ptr.vmem [resolvable:$true] %s29
      %32 = dma.vmem_to_hbm [thread:$0]  %s30, 128, %s1, [#allocation4]
    $region13: #{tpu_custom_call.1} parent=1 // pred_fallthru
      _
    // Predicated region
    $region14: #{tpu_custom_call.1} parent=1 // pred_check
      _
    $region15: #{tpu_custom_call.1} parent=1 // pred_check_branch
      %34 = sbr.rel (0) target = $region17
    $region16: #{tpu_custom_call.1} parent=1 // pred_region
      %35 = dma.done [#allocation4], 128
    $region17: #{tpu_custom_call.1} parent=1 // pred_fallthru
      _
    %36 = vsyncpa [#allocation3], 1
    %37 = vsyncpa [#allocation4], 1

</llo_original>
